<compile_context>
chip_gen: v6e
topology: v6e:2x2x1
jax: 0.10.0
libtpu: 0.0.40
codegen_flags: <defaults>
</compile_context>

<pallas_src>
import jax
import jax.numpy as jnp
from jax.experimental import pallas as pl
from jax.experimental.pallas import tpu as pltpu

NUM_FUTURE_STEPS = 12  # the hard-coded repeat(1, 12, 1) in the module


def _cvm_kernel(obs_ref, w2_ref, b_ref, out_ref):
    # obs_ref: (TB, 2F)  -- [obs[T-2], obs[T-1]] flattened per row
    # w2_ref:  (2F, O)   -- [-Wf; Wf] folded Linear weight (resident)
    # b_ref:   (1, O)    -- bias (resident)
    # out_ref: (TB, O)
    # NOTE: K = 2F is tiny, so the MXU is barely used; this stays
    # memory/overhead-bound, so jnp.dot is fine (see review: VPU-FMA variant
    # only matters if this ever fuses into an MXU-bound kernel).
    y = jnp.dot(obs_ref[...], w2_ref[...], preferred_element_type=jnp.float32)
    out_ref[...] = (y + b_ref[...]).astype(out_ref.dtype)


def _round_up(x, m):
    return ((x + m - 1) // m) * m


def _choose_tiling(B, tb_max=8192):
    """Pick (TB, B_pad) minimizing padded rows and grid-step overhead.

    Guarantees >= 2 grid steps whenever B > 8 so the batch axis can shard
    across both TensorCores on v7x; on v5e/v6e the extra step is harmless.
    """
    B8 = _round_up(B, 8)
    n_steps = max(pl.cdiv(B8, tb_max), 2 if B8 > 8 else 1)
    TB = _round_up(pl.cdiv(B8, n_steps), 8)
    B_pad = _round_up(max(B8, TB), TB)
    return TB, B_pad


def constant_velocity_forward(observed, weight, bias, *, tile_b=8192):
    """Forward pass of ConstantVelocityModel.

    observed: (B, T, F) float32
    weight:   (O, 12*F) float32   -- nn.Linear.weight layout (out, in)
    bias:     (O,)      float32   -- nn.Linear.bias
    returns:  (B, O)
    """
    B, T, F = observed.shape
    if T < 2:
        raise ValueError("Sequence length must be at leat 2")
    O, I = weight.shape
    assert I == NUM_FUTURE_STEPS * F, "Linear input_size must be 12*F"

    # --- wrapper-side preprocessing (cheap; hoist out of hot loop if weights
    # are static for inference) -------------------------------------------
    # Fold the 12x repeat: tile(delta, 12) @ W.T == delta @ sum_k W.T[kF:(k+1)F]
    w_folded = weight.T.reshape(NUM_FUTURE_STEPS, F, O).sum(axis=0)       # (F, O)
    # Fold the temporal subtraction: [obs[T-2] | obs[T-1]] @ [-Wf; Wf]
    w2 = jnp.concatenate([-w_folded, w_folded], axis=0)                   # (2F, O)
    b2 = bias.reshape(1, O)                                               # (1, O)

    # Only the last two time steps are needed; flatten to a contiguous 2-D
    # slab so the kernel gets a single dense (TB, 2F) block per grid step.
    obs2 = observed[:, T - 2:T, :].reshape(B, 2 * F)                      # (B, 2F)

    # Batch tiling: minimize dead rows, keep >=2 grid steps for v7x megacore.
    TB, B_pad = _choose_tiling(B, tb_max=tile_b)
    if B_pad != B:
        # Zero pad rows -> output == bias there; sliced off below (no NaNs).
        obs2 = jnp.pad(obs2, ((0, B_pad - B), (0, 0)))

    grid = (B_pad // TB,)

    out_padded = pl.pallas_call(
        _cvm_kernel,
        out_shape=jax.ShapeDtypeStruct((B_pad, O), observed.dtype),
        grid=grid,
        in_specs=[
            pl.BlockSpec((TB, 2 * F), lambda i: (i, 0)),   # batch-tiled obs
            pl.BlockSpec((2 * F, O), lambda i: (0, 0)),    # resident weight
            pl.BlockSpec((1, O), lambda i: (0, 0)),        # resident bias
        ],
        # Unpadded O: legal since last block dim equals the full array dim;
        # avoids ~5x write amplification for small O (e.g. O=24).
        out_specs=pl.BlockSpec((TB, O), lambda i: (i, 0)),
        compiler_params=pltpu.CompilerParams(
            # batch tiles are independent -> shardable across v7x's 2 TCs
            dimension_semantics=("parallel",),
            # Working set is tiny (<~16 MiB double-buffered at TB=8192);
            # keep the limit modest so it fits comfortably on v7x (64 MiB
            # physical per TC) with headroom for compiler scratch.
            vmem_limit_bytes=32 * 1024 * 1024,
        ),
    )(obs2, w2, b2)

    return out_padded[:B] if B_pad != B else out_padded


def _reference_forward(observed, weight, bias):
    """Pure-JAX reference with the exact PyTorch op sequence."""
    obs_rel = observed[:, 1:] - observed[:, :-1]
    deltas = obs_rel[:, -1][:, None, :]                       # (B,1,F)
    y_pred_rel = jnp.tile(deltas, (1, NUM_FUTURE_STEPS, 1))   # (B,12,F)
    x = y_pred_rel.reshape(y_pred_rel.shape[0], -1)           # (B,12*F)
    return x @ weight.T + bias


if __name__ == "__main__":
    key = jax.random.PRNGKey(0)
    k_obs, k_w, k_b = jax.random.split(key, 3)

    # Small shapes consistent with the module:
    #   B=2 trajectories, T=8 observed steps, F=2 coords (x, y)
    #   input_size  = 12 * F = 24
    #   output_size = 24 (12 predicted relative displacements)
    B, T, F = 2, 8, 2
    input_size = NUM_FUTURE_STEPS * F
    output_size = NUM_FUTURE_STEPS * F

    observed = jax.random.normal(k_obs, (B, T, F), dtype=jnp.float32)

    # PyTorch-style Linear init: uniform(-1/sqrt(in), 1/sqrt(in))
    bound = 1.0 / jnp.sqrt(jnp.float32(input_size))
    weight = jax.random.uniform(
        k_w, (output_size, input_size), dtype=jnp.float32,
        minval=-bound, maxval=bound)            # (O, I) like nn.Linear.weight
    bias = jax.random.uniform(
        k_b, (output_size,), dtype=jnp.float32,
        minval=-bound, maxval=bound)

    out = constant_velocity_forward(observed, weight, bias)
    out = jax.block_until_ready(out)

    ref = _reference_forward(observed, weight, bias)
    assert out.shape == (B, output_size)
    # Weight folding changes f32 summation order slightly vs. the tiled
    # matmul, so compare with a (still tight) tolerance.
    assert jnp.allclose(out, ref, atol=1e-5, rtol=1e-5), (
        f"max abs err = {jnp.max(jnp.abs(out - ref))}")

    print("KERNEL_OK")
</pallas_src>

<mosaic_0001>
module attributes {stable_mosaic.version = 11 : i64} {
  func.func @_cvm_kernel(%arg0: i32, %arg1: memref<8x4xf32, #tpu.memory_space<vmem>>, %arg2: memref<4x24xf32, #tpu.memory_space<vmem>>, %arg3: memref<1x24xf32, #tpu.memory_space<vmem>>, %arg4: memref<8x24xf32, #tpu.memory_space<vmem>>) attributes {dimension_semantics = [#tpu.dimension_semantics<parallel>], iteration_bounds = array<i64: 1>, scalar_prefetch = 0 : i64, scratch_operands = 0 : i64, tpu.core_type = #tpu.core_type<tc>, window_params = [{transform_indices = @transform_0, window_bounds = array<i64: 8, 4>}, {pipeline_mode = #tpu.pipeline_mode<synchronous>, transform_indices = @transform_1, window_bounds = array<i64: 4, 24>}, {pipeline_mode = #tpu.pipeline_mode<synchronous>, transform_indices = @transform_2, window_bounds = array<i64: 1, 24>}, {transform_indices = @transform_3, window_bounds = array<i64: 8, 24>}]} {
    %c0 = arith.constant 0 : index
    %c0_0 = arith.constant 0 : index
    %0 = vector.load %arg1[%c0, %c0_0] : memref<8x4xf32, #tpu.memory_space<vmem>>, vector<8x4xf32>
    %c0_1 = arith.constant 0 : index
    %c0_2 = arith.constant 0 : index
    %1 = vector.load %arg2[%c0_1, %c0_2] : memref<4x24xf32, #tpu.memory_space<vmem>>, vector<4x24xf32>
    %cst = arith.constant dense<0.000000e+00> : vector<8x24xf32>
    %2 = tpu.matmul %0, %1, %cst {dimension_numbers = #tpu.dot_dimension_numbers<[1], [0], [0], [1], [0, 0, 1, 1], [], []>} : vector<8x4xf32>, vector<4x24xf32>, vector<8x24xf32> -> vector<8x24xf32>
    %c0_3 = arith.constant 0 : index
    %c0_4 = arith.constant 0 : index
    %3 = vector.load %arg3[%c0_3, %c0_4] : memref<1x24xf32, #tpu.memory_space<vmem>>, vector<1x24xf32>
    %4 = vector.broadcast %3 : vector<1x24xf32> to vector<8x24xf32>
    %5 = arith.addf %2, %4 : vector<8x24xf32>
    %c0_5 = arith.constant 0 : index
    %c0_6 = arith.constant 0 : index
    %6 = vector.load %arg4[%c0_5, %c0_6] : memref<8x24xf32, #tpu.memory_space<vmem>>, vector<8x24xf32>
    tpu.vector_store %arg4[%c0_5, %c0_6], %5 {strides = array<i32>} : memref<8x24xf32, #tpu.memory_space<vmem>>, vector<8x24xf32>,
    return
  }
  func.func @transform_0(%arg0: i32) -> (i32, i32) {
    %c0_i32 = arith.constant 0 : i32
    %c0_i32_0 = arith.constant 0 : i32
    return %arg0, %c0_i32 : i32, i32
  }
  func.func @transform_1(%arg0: i32) -> (i32, i32) {
    %c0_i32 = arith.constant 0 : i32
    %c0_i32_0 = arith.constant 0 : i32
    %c0_i32_1 = arith.constant 0 : i32
    return %c0_i32, %c0_i32_0 : i32, i32
  }
  func.func @transform_2(%arg0: i32) -> (i32, i32) {
    %c0_i32 = arith.constant 0 : i32
    %c0_i32_0 = arith.constant 0 : i32
    %c0_i32_1 = arith.constant 0 : i32
    return %c0_i32, %c0_i32_0 : i32, i32
  }
  func.func @transform_3(%arg0: i32) -> (i32, i32) {
    %c0_i32 = arith.constant 0 : i32
    %c0_i32_0 = arith.constant 0 : i32
    return %arg0, %c0_i32 : i32, i32
  }
}

</mosaic_0001>

<llo_original>
// kernel: tpu_custom_call.1
$region0: #{tpu_custom_call.1}
  #allocation0 [shape = 'u32[]', space=smem, size = 0x4, offset = 0x4, fixed_abs, tag = 'smem constant byte address 0x4 - core index']
  #allocation1 [shape = 'u32[144,128]{1,0:T(1,128)}', space=vmem, size = 0x12000, scoped, tag = 'internal scratch']
  %s0 = inlined_call_operand.vmem [shape: f32[8,4], index: 0, kind: input, shape index: {}]
  %s1 = inlined_call_operand.vmem [shape: f32[4,24], index: 1, kind: input, shape index: {}]
  %s2 = inlined_call_operand.vmem [shape: f32[1,24], index: 2, kind: input, shape index: {}]
  %s3 = inlined_call_operand.hbm [shape: f32[8,24], index: 3, kind: output, shape index: {}]
  %s4 = sld [smem:[#allocation0]]
  $region22: #{tpu_custom_call.1} parent=0
    _
  %s6 = ssub.s32 1, %s4
  %s7 = scalar_select 0, %s6, %s4
  $region1: #{tpu_custom_call.1} parent=0
    #allocation2 [shape = 'u8[4096]{0}', space=vmem, size = 0x1000, scoped, tag = 'output window, operand 0, single buffered']
    #allocation3 [shape = 's32[1]{0}', space=sflag, size = 0x4, scoped, tag = 'scoped memory for tpu_custom_call.1']
    %8 = vsyncpa [#allocation3], 0
    // Predicated region
    $region2: #{tpu_custom_call.1} parent=1 // pred_check
      _
    $region3: #{tpu_custom_call.1} parent=1 // pred_check_branch
      %10 = sbr.rel (0) target = $region5
    $region4: #{tpu_custom_call.1} parent=1 // pred_region
      _
    $region5: #{tpu_custom_call.1} parent=1 // pred_fallthru
      _
    // Predicated region
    $region6: #{tpu_custom_call.1} parent=1 // pred_check
      _
    $region7: #{tpu_custom_call.1} parent=1 // pred_check_branch
      %12 = sbr.rel (0) target = $region9
    $region8: #{tpu_custom_call.1} parent=1 // pred_region
      _
    $region9: #{tpu_custom_call.1} parent=1 // pred_fallthru
      _
    // Predicated region
    $region10: #{tpu_custom_call.1} parent=1 // pred_check
      _
    $region11: #{tpu_custom_call.1} parent=1 // pred_check_branch
      %14 = sbr.rel (0) target = $region13
    $region12: #{tpu_custom_call.1} parent=1 // pred_region
      _
    $region13: #{tpu_custom_call.1} parent=1 // pred_fallthru
      _
    %v15 = vld [vmem:[%s0] sm:$0xff]
    %v16 = vld [vmem:[%s1] sm:$0xf]
    %v17 = vld [vmem:[%s2] sm:$0x1]
    %v19 = vlaneseq
    %v20 = vshrl.u32 %v19, 7
    %v21 = vsub.s32 0, %v20
    %v22 = vrot.slane %v17, %v21
    %vm24 = vcmask 31744
    %v26 = vsel %vm24, %v15, 0
    %vm28 = vcmask 1043456
    %v30 = vsel %vm28, %v16, 0
    %32 = vmatprep.subr.mxu0 0.0
    %33 = vmatpush1.msra.mxu0 0.0
    %34 = vmatprep.subr.mxu0 0.0
    %35 = vmatpush1.msra.mxu0 0.0
    %36 = vmatprep.subr.mxu0 0.0
    %37 = vmatpush1.msra.mxu0 0.0
    %38 = vmatprep.subr.mxu0 0.0
    %39 = vmatpush1.msra.mxu0 0.0
    %40 = vmatprep.subr.mxu0 0.0
    %41 = vmatpush1.msra.mxu0 0.0
    %42 = vmatprep.subr.mxu0 0.0
    %43 = vmatpush1.msra.mxu0 0.0
    %44 = vmatprep.subr.mxu0 0.0
    %45 = vmatpush1.msra.mxu0 0.0
    %46 = vmatprep.subr.mxu0 0.0
    %47 = vmatpush1.msra.mxu0 0.0
    %48 = vmatprep.subr.mxu0 0.0
    %49 = vmatpush1.msra.mxu0 0.0
    %50 = vmatprep.subr.mxu0 0.0
    %51 = vmatpush1.msra.mxu0 0.0
    %52 = vmatprep.subr.mxu0 0.0
    %53 = vmatpush1.msra.mxu0 0.0
    %54 = vmatprep.subr.mxu0 0.0
    %55 = vmatpush1.msra.mxu0 0.0
    %56 = vmatprep.subr.mxu0 0.0
    %57 = vmatpush1.msra.mxu0 0.0
    %58 = vmatprep.subr.mxu0 0.0
    %59 = vmatpush1.msra.mxu0 0.0
    %60 = vmatprep.subr.mxu0 0.0
    %61 = vmatpush1.msra.mxu0 0.0
    %62 = vmatprep.subr.mxu0 0.0
    %63 = vmatpush1.msra.mxu0 %v30
    %64 = vmatprep.subr.mxu0 0.0
    %65 = vmatpush2.msra.mxu0 0.0
    %66 = vmatprep.subr.mxu0 0.0
    %67 = vmatpush2.msra.mxu0 0.0
    %68 = vmatprep.subr.mxu0 0.0
    %69 = vmatpush2.msra.mxu0 0.0
    %70 = vmatprep.subr.mxu0 0.0
    %71 = vmatpush2.msra.mxu0 0.0
    %72 = vmatprep.subr.mxu0 0.0
    %73 = vmatpush2.msra.mxu0 0.0
    %74 = vmatprep.subr.mxu0 0.0
    %75 = vmatpush2.msra.mxu0 0.0
    %76 = vmatprep.subr.mxu0 0.0
    %77 = vmatpush2.msra.mxu0 0.0
    %78 = vmatprep.subr.mxu0 0.0
    %79 = vmatpush2.msra.mxu0 0.0
    %80 = vmatprep.subr.mxu0 0.0
    %81 = vmatpush2.msra.mxu0 0.0
    %82 = vmatprep.subr.mxu0 0.0
    %83 = vmatpush2.msra.mxu0 0.0
    %84 = vmatprep.subr.mxu0 0.0
    %85 = vmatpush2.msra.mxu0 0.0
    %86 = vmatprep.subr.mxu0 0.0
    %87 = vmatpush2.msra.mxu0 0.0
    %88 = vmatprep.subr.mxu0 0.0
    %89 = vmatpush2.msra.mxu0 0.0
    %90 = vmatprep.subr.mxu0 0.0
    %91 = vmatpush2.msra.mxu0 0.0
    %92 = vmatprep.subr.mxu0 0.0
    %93 = vmatpush2.msra.mxu0 0.0
    %94 = vmatprep.subr.mxu0 0.0
    %95 = vmatpush2.msra.mxu0 0.0
    %96 = vmatprep.mubr.f32.mxu0 0.0
    %97 = vmatmul.mubr.f32.gmra.mxu0 %v26
    %v98 = vpop.f32.mrf.mxu0
    %v99 = vadd.f32 %v22, %v98
    %v100 = vpop.f32.mrf.mxu0
    %101 = vdwg.mxu0
    %vm102 = vcmask 195584
    %103 = vst.msk [vmem:[#allocation2] sm:$0xff] %vm102, %v99
    // Predicated region
    $region14: #{tpu_custom_call.1} parent=1 // pred_check
      _
    $region15: #{tpu_custom_call.1} parent=1 // pred_check_branch
      %105 = sbr.rel (0) target = $region17
    $region16: #{tpu_custom_call.1} parent=1 // pred_region
      %s107 = ssub.s32 128, 128
      %108 = vsyncadd [#allocation3], %s107
      %s110 = sshll.u32 [#allocation2], 4
      %s111 = int_to_ptr.vmem [resolvable:$true] %s110
      %113 = dma.vmem_to_hbm [thread:$0]  %s111, 128, %s3, [#allocation3]
    $region17: #{tpu_custom_call.1} parent=1 // pred_fallthru
      _
    // Predicated region
    $region18: #{tpu_custom_call.1} parent=1 // pred_check
      _
    $region19: #{tpu_custom_call.1} parent=1 // pred_check_branch
      %115 = sbr.rel (0) target = $region21
    $region20: #{tpu_custom_call.1} parent=1 // pred_region
      %116 = dma.done [#allocation3], 128
    $region21: #{tpu_custom_call.1} parent=1 // pred_fallthru
      _
    %117 = vsyncpa [#allocation3], 1

</llo_original>
